<compile_context>
chip_gen: v7x
topology: tpu7x:2x2x1
jax: 0.10.0
libtpu: 0.0.40
codegen_flags: <defaults>
</compile_context>

<pallas_src>
import jax
import jax.numpy as jnp
import numpy as np
from jax.experimental import pallas as pl
from jax.experimental.pallas import tpu as pltpu

TN = 512      # batch tile (lane axis); sweep 512-1024 for large N
F_IN = 8      # padded input rows (real input is 2 features)
F = 16        # hidden width


# ----------------------------------------------------------------------------
# Pallas kernel: full forward pass for one batch tile of TN points.
#   x_ref  : (F_IN, TN)  input points, feature-on-sublane / batch-on-lane
#   wf_ref : (F, F_IN)   first-layer weight (normalization folded in)
#   w_ref  : (5, F, F)   stacked weights for layers 1..5
#   b_ref  : (6, F, 1)   stacked biases for layers 0..5
#   o_ref  : (1, TN)     network output (lane-dense row)
# ----------------------------------------------------------------------------
def fcn_kernel(x_ref, wf_ref, w_ref, b_ref, o_ref):
    # Layer 0: sparse 2->4 (with (x-lb)/(ub-lb) folded into wf/b), tanh.
    a = jnp.tanh(
        jnp.dot(wf_ref[...], x_ref[...], preferred_element_type=jnp.float32)
        + b_ref[0])
    # Layers 1..4: sparse 4->16 then 3x dense 16->16, tanh each.
    for j in range(4):
        a = jnp.tanh(
            jnp.dot(w_ref[j], a, preferred_element_type=jnp.float32)
            + b_ref[j + 1])
    # Layer 5: sparse 16->1 (row 0 of the padded 16x16 weight), no activation.
    z = jnp.dot(w_ref[4], a, preferred_element_type=jnp.float32) + b_ref[5]
    o_ref[...] = z[0:1, :].astype(o_ref.dtype)


# ----------------------------------------------------------------------------
# Parameter construction (deterministic, mirrors the torch __init__ shapes).
# ----------------------------------------------------------------------------
def make_raw_params(key):
    ks = jax.random.split(key, 9)
    lim = 0.01  # nn.init.uniform_(w, -0.01, 0.01)
    raw = {
        "lb": jnp.array([-1.0, -1.0], jnp.float32),
        "ub": jnp.array([1.0, 1.0], jnp.float32),
        "w0": jax.random.uniform(ks[0], (4,), jnp.float32, -lim, lim),
        "b0": jnp.zeros((4,), jnp.float32),
        "w1": jax.random.uniform(ks[1], (16,), jnp.float32, -lim, lim),
        "b1": jnp.zeros((16,), jnp.float32),
        "w2": jax.random.uniform(ks[2], (16,), jnp.float32, -lim, lim),
        "b2": jnp.zeros((16,), jnp.float32),
    }
    bound = 1.0 / np.sqrt(16.0)  # nn.Linear default init range
    dense = []
    for k in range(3):  # only linears[2:5] are used in forward
        Wt = jax.random.uniform(ks[3 + k], (16, 16), jnp.float32, -bound, bound)
        b = jax.random.uniform(ks[6 + k], (16,), jnp.float32, -bound, bound)
        dense.append((Wt, b))  # torch layout (out, in); y = x @ Wt.T + b
    raw["dense"] = dense
    return raw


def pack_params(raw):
    """Pack torch-shaped params into the kernel's stacked small-matrix layout."""
    lb, ub = raw["lb"], raw["ub"]
    scale = 1.0 / (ub - lb)          # (2,)
    offset = -lb * scale             # (2,)   x_norm = x*scale + offset

    # Layer 0 (sparse 2->4) with normalization folded in:
    #   z[i] = x[i//2]*(w0[i]*scale[i//2]) + (w0[i]*offset[i//2] + b0[i])
    w0, b0 = raw["w0"], raw["b0"]
    r4 = jnp.arange(4)
    w_first = (jnp.zeros((F, F_IN), jnp.float32)
               .at[r4, r4 // 2].set(w0 * scale[r4 // 2]))
    b_first = (jnp.zeros((F,), jnp.float32)
               .at[r4].set(w0 * offset[r4 // 2] + b0))

    # Layer 1 (sparse 4->16): z[i] = a[i//4]*w1[i] + b1[i]
    w1, b1 = raw["w1"], raw["b1"]
    r16 = jnp.arange(16)
    W1 = jnp.zeros((F, F), jnp.float32).at[r16, r16 // 4].set(w1)

    Ws = [W1]
    bs = [b_first, b1]
    # Layers 2..4: dense 16->16, torch (out, in) is already the right
    # orientation for z = W @ a_col.
    for Wt, b in raw["dense"]:
        Ws.append(Wt.astype(jnp.float32))
        bs.append(b.astype(jnp.float32))

    # Layer 5 (sparse 16->1): row 0 = w2, bias row 0 = sum(b2).
    w2, b2 = raw["w2"], raw["b2"]
    W_last = jnp.zeros((F, F), jnp.float32).at[0, :].set(w2)
    b_last = jnp.zeros((F,), jnp.float32).at[0].set(jnp.sum(b2))
    Ws.append(W_last)
    bs.append(b_last)

    w_rest = jnp.stack(Ws, axis=0)             # (5, 16, 16)
    b_all = jnp.stack(bs, axis=0)[..., None]   # (6, 16, 1)
    return w_first, w_rest, b_all


# ----------------------------------------------------------------------------
# Wrapper: lays the batch out along lanes and launches the kernel.
# ----------------------------------------------------------------------------
@jax.jit
def fcn_forward(x, params):
    w_first, w_rest, b_all = params
    N = x.shape[0]
    n_tiles = pl.cdiv(N, TN)           # handles N not a multiple of TN
    n_pad = n_tiles * TN

    # (N, 2) -> (8, N_pad): features on sublanes, batch on lanes; rows 2..7
    # and the tail columns are zero-padded (sliced away after the kernel).
    x_col = jnp.zeros((F_IN, n_pad), jnp.float32).at[:2, :N].set(
        jnp.asarray(x, jnp.float32).T)

    out = pl.pallas_call(
        fcn_kernel,
        out_shape=jax.ShapeDtypeStruct((1, n_pad), jnp.float32),
        grid=(n_tiles,),
        in_specs=[
            pl.BlockSpec((F_IN, TN), lambda i: (0, i)),      # x tile
            pl.BlockSpec((F, F_IN), lambda i: (0, 0)),       # first-layer W
            pl.BlockSpec((5, F, F), lambda i: (0, 0, 0)),    # stacked Ws
            pl.BlockSpec((6, F, 1), lambda i: (0, 0, 0)),    # stacked biases
        ],
        out_specs=pl.BlockSpec((1, TN), lambda i: (0, i)),   # lane-dense row
        compiler_params=pltpu.CompilerParams(
            dimension_semantics=("parallel",)),
    )(x_col, w_first, w_rest, b_all)

    return out[0, :N].reshape(N, 1)


# ----------------------------------------------------------------------------
# Pure-JAX reference mirroring the torch forward (for correctness check).
# ----------------------------------------------------------------------------
def reference_forward(x, raw):
    a = (x - raw["lb"]) / (raw["ub"] - raw["lb"])
    cols = np.arange(4)
    a = jnp.tanh(a[:, cols // 2] * raw["w0"] + raw["b0"])
    cols = np.arange(16)
    a = jnp.tanh(a[:, cols // 4] * raw["w1"] + raw["b1"])
    for Wt, b in raw["dense"]:
        a = jnp.tanh(a @ Wt.T + b)
    return a @ raw["w2"].reshape(16, 1) + jnp.sum(raw["b2"])


if __name__ == "__main__":
    key = jax.random.PRNGKey(0)
    k_x, k_p = jax.random.split(key)

    # Non-multiple-of-TN batch to exercise the tail handling; 2 grid steps so
    # both TensorCores get work on v7x.
    N = 1000
    x = jax.random.uniform(k_x, (N, 2), jnp.float32, -1.0, 1.0)

    raw = make_raw_params(k_p)
    packed = pack_params(raw)

    y = jax.block_until_ready(fcn_forward(x, packed))
    y_ref = jax.block_until_ready(reference_forward(x, raw))

    assert y.shape == (N, 1), y.shape
    np.testing.assert_allclose(np.asarray(y), np.asarray(y_ref),
                               rtol=0.0, atol=2e-3)
    print("KERNEL_OK")
</pallas_src>

<mosaic_0001>
module attributes {stable_mosaic.version = 11 : i64} {
  func.func @fcn_kernel(%arg0: i32, %arg1: memref<8x512xf32, #tpu.memory_space<vmem>>, %arg2: memref<16x8xf32, #tpu.memory_space<vmem>>, %arg3: memref<5x16x16xf32, #tpu.memory_space<vmem>>, %arg4: memref<6x16x1xf32, #tpu.memory_space<vmem>>, %arg5: memref<1x512xf32, #tpu.memory_space<vmem>>) attributes {dimension_semantics = [#tpu.dimension_semantics<parallel>], iteration_bounds = array<i64: 2>, scalar_prefetch = 0 : i64, scratch_operands = 0 : i64, tpu.core_type = #tpu.core_type<tc>, window_params = [{transform_indices = @transform_0, window_bounds = array<i64: 8, 512>}, {pipeline_mode = #tpu.pipeline_mode<synchronous>, transform_indices = @transform_1, window_bounds = array<i64: 16, 8>}, {pipeline_mode = #tpu.pipeline_mode<synchronous>, transform_indices = @transform_2, window_bounds = array<i64: 5, 16, 16>}, {pipeline_mode = #tpu.pipeline_mode<synchronous>, transform_indices = @transform_3, window_bounds = array<i64: 6, 16, 1>}, {transform_indices = @transform_4, window_bounds = array<i64: 1, 512>}]} {
    %c0 = arith.constant 0 : index
    %c0_0 = arith.constant 0 : index
    %0 = vector.load %arg2[%c0, %c0_0] : memref<16x8xf32, #tpu.memory_space<vmem>>, vector<16x8xf32>
    %c0_1 = arith.constant 0 : index
    %c0_2 = arith.constant 0 : index
    %1 = vector.load %arg1[%c0_1, %c0_2] : memref<8x512xf32, #tpu.memory_space<vmem>>, vector<8x512xf32>
    %cst = arith.constant dense<0.000000e+00> : vector<16x512xf32>
    %2 = tpu.matmul %0, %1, %cst {dimension_numbers = #tpu.dot_dimension_numbers<[1], [0], [0], [1], [0, 0, 1, 1], [], []>} : vector<16x8xf32>, vector<8x512xf32>, vector<16x512xf32> -> vector<16x512xf32>
    %c0_3 = arith.constant 0 : index
    %c0_4 = arith.constant 0 : index
    %c0_5 = arith.constant 0 : index
    %3 = vector.load %arg4[%c0_3, %c0_4, %c0_5] : memref<6x16x1xf32, #tpu.memory_space<vmem>>, vector<1x16x1xf32>
    %4 = vector.shape_cast %3 : vector<1x16x1xf32> to vector<16x1xf32>
    %5 = vector.broadcast %4 : vector<16x1xf32> to vector<16x512xf32>
    %6 = arith.addf %2, %5 : vector<16x512xf32>
    %7 = math.tanh %6 : vector<16x512xf32>
    %c0_6 = arith.constant 0 : index
    %c0_7 = arith.constant 0 : index
    %c0_8 = arith.constant 0 : index
    %8 = vector.load %arg3[%c0_6, %c0_7, %c0_8] : memref<5x16x16xf32, #tpu.memory_space<vmem>>, vector<1x16x16xf32>
    %9 = vector.shape_cast %8 : vector<1x16x16xf32> to vector<16x16xf32>
    %cst_9 = arith.constant dense<0.000000e+00> : vector<16x512xf32>
    %10 = tpu.matmul %9, %7, %cst_9 {dimension_numbers = #tpu.dot_dimension_numbers<[1], [0], [0], [1], [0, 0, 1, 1], [], []>} : vector<16x16xf32>, vector<16x512xf32>, vector<16x512xf32> -> vector<16x512xf32>
    %c1 = arith.constant 1 : index
    %c0_10 = arith.constant 0 : index
    %c0_11 = arith.constant 0 : index
    %11 = vector.load %arg4[%c1, %c0_10, %c0_11] : memref<6x16x1xf32, #tpu.memory_space<vmem>>, vector<1x16x1xf32>
    %12 = vector.shape_cast %11 : vector<1x16x1xf32> to vector<16x1xf32>
    %13 = vector.broadcast %12 : vector<16x1xf32> to vector<16x512xf32>
    %14 = arith.addf %10, %13 : vector<16x512xf32>
    %15 = math.tanh %14 : vector<16x512xf32>
    %c1_12 = arith.constant 1 : index
    %c0_13 = arith.constant 0 : index
    %c0_14 = arith.constant 0 : index
    %16 = vector.load %arg3[%c1_12, %c0_13, %c0_14] : memref<5x16x16xf32, #tpu.memory_space<vmem>>, vector<1x16x16xf32>
    %17 = vector.shape_cast %16 : vector<1x16x16xf32> to vector<16x16xf32>
    %cst_15 = arith.constant dense<0.000000e+00> : vector<16x512xf32>
    %18 = tpu.matmul %17, %15, %cst_15 {dimension_numbers = #tpu.dot_dimension_numbers<[1], [0], [0], [1], [0, 0, 1, 1], [], []>} : vector<16x16xf32>, vector<16x512xf32>, vector<16x512xf32> -> vector<16x512xf32>
    %c2 = arith.constant 2 : index
    %c0_16 = arith.constant 0 : index
    %c0_17 = arith.constant 0 : index
    %19 = vector.load %arg4[%c2, %c0_16, %c0_17] : memref<6x16x1xf32, #tpu.memory_space<vmem>>, vector<1x16x1xf32>
    %20 = vector.shape_cast %19 : vector<1x16x1xf32> to vector<16x1xf32>
    %21 = vector.broadcast %20 : vector<16x1xf32> to vector<16x512xf32>
    %22 = arith.addf %18, %21 : vector<16x512xf32>
    %23 = math.tanh %22 : vector<16x512xf32>
    %c2_18 = arith.constant 2 : index
    %c0_19 = arith.constant 0 : index
    %c0_20 = arith.constant 0 : index
    %24 = vector.load %arg3[%c2_18, %c0_19, %c0_20] : memref<5x16x16xf32, #tpu.memory_space<vmem>>, vector<1x16x16xf32>
    %25 = vector.shape_cast %24 : vector<1x16x16xf32> to vector<16x16xf32>
    %cst_21 = arith.constant dense<0.000000e+00> : vector<16x512xf32>
    %26 = tpu.matmul %25, %23, %cst_21 {dimension_numbers = #tpu.dot_dimension_numbers<[1], [0], [0], [1], [0, 0, 1, 1], [], []>} : vector<16x16xf32>, vector<16x512xf32>, vector<16x512xf32> -> vector<16x512xf32>
    %c3 = arith.constant 3 : index
    %c0_22 = arith.constant 0 : index
    %c0_23 = arith.constant 0 : index
    %27 = vector.load %arg4[%c3, %c0_22, %c0_23] : memref<6x16x1xf32, #tpu.memory_space<vmem>>, vector<1x16x1xf32>
    %28 = vector.shape_cast %27 : vector<1x16x1xf32> to vector<16x1xf32>
    %29 = vector.broadcast %28 : vector<16x1xf32> to vector<16x512xf32>
    %30 = arith.addf %26, %29 : vector<16x512xf32>
    %31 = math.tanh %30 : vector<16x512xf32>
    %c3_24 = arith.constant 3 : index
    %c0_25 = arith.constant 0 : index
    %c0_26 = arith.constant 0 : index
    %32 = vector.load %arg3[%c3_24, %c0_25, %c0_26] : memref<5x16x16xf32, #tpu.memory_space<vmem>>, vector<1x16x16xf32>
    %33 = vector.shape_cast %32 : vector<1x16x16xf32> to vector<16x16xf32>
    %cst_27 = arith.constant dense<0.000000e+00> : vector<16x512xf32>
    %34 = tpu.matmul %33, %31, %cst_27 {dimension_numbers = #tpu.dot_dimension_numbers<[1], [0], [0], [1], [0, 0, 1, 1], [], []>} : vector<16x16xf32>, vector<16x512xf32>, vector<16x512xf32> -> vector<16x512xf32>
    %c4 = arith.constant 4 : index
    %c0_28 = arith.constant 0 : index
    %c0_29 = arith.constant 0 : index
    %35 = vector.load %arg4[%c4, %c0_28, %c0_29] : memref<6x16x1xf32, #tpu.memory_space<vmem>>, vector<1x16x1xf32>
    %36 = vector.shape_cast %35 : vector<1x16x1xf32> to vector<16x1xf32>
    %37 = vector.broadcast %36 : vector<16x1xf32> to vector<16x512xf32>
    %38 = arith.addf %34, %37 : vector<16x512xf32>
    %39 = math.tanh %38 : vector<16x512xf32>
    %c4_30 = arith.constant 4 : index
    %c0_31 = arith.constant 0 : index
    %c0_32 = arith.constant 0 : index
    %40 = vector.load %arg3[%c4_30, %c0_31, %c0_32] : memref<5x16x16xf32, #tpu.memory_space<vmem>>, vector<1x16x16xf32>
    %41 = vector.shape_cast %40 : vector<1x16x16xf32> to vector<16x16xf32>
    %cst_33 = arith.constant dense<0.000000e+00> : vector<16x512xf32>
    %42 = tpu.matmul %41, %39, %cst_33 {dimension_numbers = #tpu.dot_dimension_numbers<[1], [0], [0], [1], [0, 0, 1, 1], [], []>} : vector<16x16xf32>, vector<16x512xf32>, vector<16x512xf32> -> vector<16x512xf32>
    %c5 = arith.constant 5 : index
    %c0_34 = arith.constant 0 : index
    %c0_35 = arith.constant 0 : index
    %43 = vector.load %arg4[%c5, %c0_34, %c0_35] : memref<6x16x1xf32, #tpu.memory_space<vmem>>, vector<1x16x1xf32>
    %44 = vector.shape_cast %43 : vector<1x16x1xf32> to vector<16x1xf32>
    %45 = vector.broadcast %44 : vector<16x1xf32> to vector<16x512xf32>
    %46 = arith.addf %42, %45 : vector<16x512xf32>
    %47 = vector.extract_strided_slice %46 {offsets = [0, 0], sizes = [1, 512], strides = [1, 1]} : vector<16x512xf32> to vector<1x512xf32>
    %c0_36 = arith.constant 0 : index
    %c0_37 = arith.constant 0 : index
    %48 = vector.load %arg5[%c0_36, %c0_37] : memref<1x512xf32, #tpu.memory_space<vmem>>, vector<1x512xf32>
    tpu.vector_store %arg5[%c0_36, %c0_37], %47 {strides = array<i32>} : memref<1x512xf32, #tpu.memory_space<vmem>>, vector<1x512xf32>,
    return
  }
  func.func @transform_0(%arg0: i32) -> (i32, i32) {
    %c0_i32 = arith.constant 0 : i32
    %c0_i32_0 = arith.constant 0 : i32
    return %c0_i32, %arg0 : i32, i32
  }
  func.func @transform_1(%arg0: i32) -> (i32, i32) {
    %c0_i32 = arith.constant 0 : i32
    %c0_i32_0 = arith.constant 0 : i32
    %c0_i32_1 = arith.constant 0 : i32
    return %c0_i32, %c0_i32_0 : i32, i32
  }
  func.func @transform_2(%arg0: i32) -> (i32, i32, i32) {
    %c0_i32 = arith.constant 0 : i32
    %c0_i32_0 = arith.constant 0 : i32
    %c0_i32_1 = arith.constant 0 : i32
    %c0_i32_2 = arith.constant 0 : i32
    return %c0_i32, %c0_i32_0, %c0_i32_1 : i32, i32, i32
  }
  func.func @transform_3(%arg0: i32) -> (i32, i32, i32) {
    %c0_i32 = arith.constant 0 : i32
    %c0_i32_0 = arith.constant 0 : i32
    %c0_i32_1 = arith.constant 0 : i32
    %c0_i32_2 = arith.constant 0 : i32
    return %c0_i32, %c0_i32_0, %c0_i32_1 : i32, i32, i32
  }
  func.func @transform_4(%arg0: i32) -> (i32, i32) {
    %c0_i32 = arith.constant 0 : i32
    %c0_i32_0 = arith.constant 0 : i32
    return %c0_i32, %arg0 : i32, i32
  }
}

</mosaic_0001>

<llo_original>
// kernel: fcn_forward.1
$region0: #{fcn_forward.1}
  #allocation0 [shape = 'u32[]', space=smem, size = 0x4, offset = 0x4, fixed_abs, tag = 'smem constant byte address 0x4 - core index']
  #allocation1 [shape = 'u32[144,128]{1,0:T(1,128)}', space=vmem, size = 0x12000, scoped, tag = 'internal scratch']
  %s0 = inlined_call_operand.vmem [shape: f32[8,1024], index: 0, kind: input, shape index: {}]
  %s1 = inlined_call_operand.vmem [shape: f32[16,8], index: 1, kind: input, shape index: {}]
  %s2 = inlined_call_operand.vmem [shape: f32[5,16,16], index: 2, kind: input, shape index: {}]
  %s3 = inlined_call_operand.vmem [shape: f32[6,16,1], index: 3, kind: input, shape index: {}]
  %s4 = inlined_call_operand.vmem [shape: f32[1,1024], index: 4, kind: output, shape index: {}]
  %s5 = sld [smem:[#allocation0]]
  $region49: #{fcn_forward.1} parent=0
    _
  %s7 = ssub.s32 1, %s5
  %s8 = scalar_select 0, %s7, %s5
  loop: start=0, step=1, limit=4
  $region2: #{fcn_forward.1} parent=0 // loop_pre_header
    _
  $region3: #{fcn_forward.1} parent=0 // loop_header
    %s10 = sphi 0, %s14
    %p11 = scmp.ge.s32.totalorder %s10, 4
    %s20 = sphi 0, %s22
    %s23 = sphi 0, %s20
    %s24 = sphi 0, %s23
    %s40 = sphi 0, %s24
    %s44 = sphi 0, %s44
    %s46 = sphi 0, %s44
    %s47 = sphi 0, %s46
    %s61 = sphi 0, %s47
    %s65 = sphi 0, %s65
    %s67 = sphi 0, %s65
    %s68 = sphi 0, %s67
    %s82 = sphi 0, %s68
    %s86 = sphi 0, %s86
    %s88 = sphi 0, %s86
    %s89 = sphi 0, %s88
    %s103 = sphi 0, %s89
    %s109 = sphi 0, %s111
    %s112 = sphi 0, %s109
    %s113 = sphi 0, %s112
    %s129 = sphi 0, %s113
  $region4: #{fcn_forward.1} parent=0 // loop_header_branch
    %13 = sbr.rel (%p11) target = $region8
  $region5: #{fcn_forward.1} parent=0 // loop_body
    %s15 = ssub.s32 %s10, 1
    %s16 = ssub.s32 %s10, 2
    %s17 = sadd.s32 %s10, 1
    %s18 = ssub.s32 %s10, %s17
    %p19 = scmp.eq.s32.totalorder %s18, 0
    %s21 = sadd.s32 %s20, 1
    %s22 = scalar_select %p19, %s20, %s21
    %p25 = pneg %p19
    %p26 = scmp.eq.s32.totalorder %s10, 1
    %p27 = por %p25, %p26
    %p28 = scmp.ne.s32.totalorder %s20, %s23
    %p29 = scmp.eq.s32.totalorder %s10, 0
    %p30 = por %p28, %p29
    %p31 = scmp.ne.s32.totalorder %s20, %s23
    %p32 = scmp.eq.s32.totalorder %s15, 1
    %p33 = por %p31, %p32
    %p34 = scmp.ne.s32.totalorder %s23, %s24
    %p35 = scmp.eq.s32.totalorder %s15, 0
    %p36 = por %p34, %p35
    %p37 = scmp.ne.s32.totalorder %s23, %s24
    %p38 = scmp.eq.s32.totalorder %s16, 1
    %p39 = por %p37, %p38
    %p41 = scmp.ne.s32.totalorder %s24, %s40
    %p42 = scmp.eq.s32.totalorder %s16, 0
    %p43 = por %p41, %p42
    %s45 = sadd.s32 %s44, 1
    %p48 = scmp.eq.s32.totalorder %s10, 1
    %p49 = scmp.ne.s32.totalorder %s44, %s46
    %p50 = scmp.eq.s32.totalorder %s10, 0
    %p51 = por %p49, %p50
    %p52 = scmp.ne.s32.totalorder %s44, %s46
    %p53 = scmp.eq.s32.totalorder %s15, 1
    %p54 = por %p52, %p53
    %p55 = scmp.ne.s32.totalorder %s46, %s47
    %p56 = scmp.eq.s32.totalorder %s15, 0
    %p57 = por %p55, %p56
    %p58 = scmp.ne.s32.totalorder %s46, %s47
    %p59 = scmp.eq.s32.totalorder %s16, 1
    %p60 = por %p58, %p59
    %p62 = scmp.ne.s32.totalorder %s47, %s61
    %p63 = scmp.eq.s32.totalorder %s16, 0
    %p64 = por %p62, %p63
    %s66 = sadd.s32 %s65, 1
    %p69 = scmp.eq.s32.totalorder %s10, 1
    %p70 = scmp.ne.s32.totalorder %s65, %s67
    %p71 = scmp.eq.s32.totalorder %s10, 0
    %p72 = por %p70, %p71
    %p73 = scmp.ne.s32.totalorder %s65, %s67
    %p74 = scmp.eq.s32.totalorder %s15, 1
    %p75 = por %p73, %p74
    %p76 = scmp.ne.s32.totalorder %s67, %s68
    %p77 = scmp.eq.s32.totalorder %s15, 0
    %p78 = por %p76, %p77
    %p79 = scmp.ne.s32.totalorder %s67, %s68
    %p80 = scmp.eq.s32.totalorder %s16, 1
    %p81 = por %p79, %p80
    %p83 = scmp.ne.s32.totalorder %s68, %s82
    %p84 = scmp.eq.s32.totalorder %s16, 0
    %p85 = por %p83, %p84
    %s87 = sadd.s32 %s86, 1
    %p90 = scmp.eq.s32.totalorder %s10, 1
    %p91 = scmp.ne.s32.totalorder %s86, %s88
    %p92 = scmp.eq.s32.totalorder %s10, 0
    %p93 = por %p91, %p92
    %p94 = scmp.ne.s32.totalorder %s86, %s88
    %p95 = scmp.eq.s32.totalorder %s15, 1
    %p96 = por %p94, %p95
    %p97 = scmp.ne.s32.totalorder %s88, %s89
    %p98 = scmp.eq.s32.totalorder %s15, 0
    %p99 = por %p97, %p98
    %p100 = scmp.ne.s32.totalorder %s88, %s89
    %p101 = scmp.eq.s32.totalorder %s16, 1
    %p102 = por %p100, %p101
    %p104 = scmp.ne.s32.totalorder %s89, %s103
    %p105 = scmp.eq.s32.totalorder %s16, 0
    %p106 = por %p104, %p105
    %s107 = ssub.s32 %s10, %s17
    %p108 = scmp.eq.s32.totalorder %s107, 0
    %s110 = sadd.s32 %s109, 1
    %s111 = scalar_select %p108, %s109, %s110
    %p114 = pneg %p108
    %p115 = scmp.eq.s32.totalorder %s10, 1
    %p116 = por %p114, %p115
    %p117 = scmp.ne.s32.totalorder %s109, %s112
    %p118 = scmp.eq.s32.totalorder %s10, 0
    %p119 = por %p117, %p118
    %p120 = scmp.ne.s32.totalorder %s109, %s112
    %p121 = scmp.eq.s32.totalorder %s15, 1
    %p122 = por %p120, %p121
    %p123 = scmp.ne.s32.totalorder %s112, %s113
    %p124 = scmp.eq.s32.totalorder %s15, 0
    %p125 = por %p123, %p124
    %p126 = scmp.ne.s32.totalorder %s112, %s113
    %p127 = scmp.eq.s32.totalorder %s16, 1
    %p128 = por %p126, %p127
    %p130 = scmp.ne.s32.totalorder %s113, %s129
    %p131 = scmp.eq.s32.totalorder %s16, 0
    %p132 = por %p130, %p131
    %p133 = scmp.le.s32.totalorder 1, %s10
    %p134 = scmp.lt.s32.totalorder %s10, 3
    %p135 = pnand %p133, %p134
    %p136 = pneg %p135
    // Predicated region
    $region9: #{fcn_forward.1} parent=5 // pred_check
      _
    $region10: #{fcn_forward.1} parent=5 // pred_check_branch
      %138 = sbr.rel (%p135) target = $region12
    $region11: #{fcn_forward.1} parent=5 // pred_region
      %s139 = ssub.s32 %s10, 1
      // Predicated region
      $region13: #{fcn_forward.1} parent=11 // pred_check
        %p140 = pneg %p57
      $region14: #{fcn_forward.1} parent=11 // pred_check_branch
        %142 = sbr.rel (%p140) target = $region16
      $region15: #{fcn_forward.1} parent=11 // pred_region
        _
      $region16: #{fcn_forward.1} parent=11 // pred_fallthru
        _
      // Predicated region
      $region17: #{fcn_forward.1} parent=11 // pred_check
        %p143 = pneg %p78
      $region18: #{fcn_forward.1} parent=11 // pred_check_branch
        %145 = sbr.rel (%p143) target = $region20
      $region19: #{fcn_forward.1} parent=11 // pred_region
        _
      $region20: #{fcn_forward.1} parent=11 // pred_fallthru
        _
      // Predicated region
      $region21: #{fcn_forward.1} parent=11 // pred_check
        %p146 = pneg %p99
      $region22: #{fcn_forward.1} parent=11 // pred_check_branch
        %148 = sbr.rel (%p146) target = $region24
      $region23: #{fcn_forward.1} parent=11 // pred_region
        _
      $region24: #{fcn_forward.1} parent=11 // pred_fallthru
        _
    $region12: #{fcn_forward.1} parent=5 // pred_fallthru
      _
    %p149 = scmp.lt.s32.totalorder %s10, 2
    // Predicated region
    $region25: #{fcn_forward.1} parent=5 // pred_check
      %p150 = pneg %p149
    $region26: #{fcn_forward.1} parent=5 // pred_check_branch
      %152 = sbr.rel (%p150) target = $region28
    $region27: #{fcn_forward.1} parent=5 // pred_region
      // Predicated region
      $region29: #{fcn_forward.1} parent=27 // pred_check
        %p153 = pneg %p30
      $region30: #{fcn_forward.1} parent=27 // pred_check_branch
        %155 = sbr.rel (%p153) target = $region32
      $region31: #{fcn_forward.1} parent=27 // pred_region
        %s156 = smul.u32 4, %s10
        %p157 = scmp.lt.s32.totalorder %s156, 7
        %s158 = scalar_select %p157, %s156, 7
        %s159 = smul.addr %s158, 8
        %s160 = scalar_lea.vmem %s0, %s159
        %s161 = smul.u32 4, %s10
      $region32: #{fcn_forward.1} parent=27 // pred_fallthru
        _
    $region28: #{fcn_forward.1} parent=5 // pred_fallthru
      _
    %p162 = scmp.le.s32.totalorder 1, %s10
    %p163 = scmp.lt.s32.totalorder %s10, 3
    %p164 = pnand %p162, %p163
    %p165 = pneg %p164
    // Predicated region
    $region33: #{fcn_forward.1} parent=5 // pred_check
      _
    $region34: #{fcn_forward.1} parent=5 // pred_check_branch
      %167 = sbr.rel (%p164) target = $region36
    $region35: #{fcn_forward.1} parent=5 // pred_region
      %s168 = ssub.s32 %s10, 1
      %s169 = smul.u32 4, %s15
      %p170 = scmp.lt.s32.totalorder %s169, 7
      %s171 = scalar_select %p170, %s169, 7
      %s172 = smul.addr %s171, 8
      %s173 = scalar_lea.vmem %s0, %s172
      %p174 = pneg %p36
      %p175 = pneg %p33
      %p176 = pneg %p57
      %p177 = pneg %p54
      %p178 = pneg %p78
      %p179 = pneg %p75
      %p180 = pneg %p99
      %p181 = pneg %p96
      %p182 = pneg %p125
      %p183 = pneg %p122
      %s184 = smul.u32 4, %s15
      %p185 = scmp.lt.s32.totalorder %s184, 7
      %s186 = scalar_select %p185, %s184, 7
      %s187 = scalar_lea.vmem %s4, %s186
      %s188 = smul.u32 4, %s15
      %p189 = scmp.lt.s32.totalorder %s188, 7
      %s190 = scalar_select %p189, %s188, 7
      %s191 = smul.addr %s190, 8
      %s192 = scalar_lea.vmem %s0, %s191
      %s193 = smul.u32 4, %s15
      %s194 = smul.u32 4, %s15
      %p195 = scmp.lt.s32.totalorder %s194, 7
      %s196 = scalar_select %p195, %s194, 7
      %s197 = scalar_lea.vmem %s4, %s196
      %s198 = smul.u32 4, %s15
      %v199 = vld [vmem:[%s1] sm:$0xff]
      %v200 = vld [vmem:[%s1 + $0x8] sm:$0xff]
      %v201 = vld [vmem:[%s192] sm:$0xff]
      %v202 = vld [vmem:[%s192 + $0x8] sm:$0xff]
      %v203 = vld [vmem:[%s192 + $0x10] sm:$0xff]
      %v204 = vld [vmem:[%s192 + $0x18] sm:$0xff]
      %v205 = vld [vmem:[%s3] sm:$0xff]
      %v206 = vld [vmem:[%s3 + $0x8] sm:$0xff]
      %208 = vset.pattern.permute.xlu0 0
      %209 = vperm.xlu0 %208, %v205
      %v210 = vpop.permute.xlu0 %209
      %213 = vset.pattern.permute.xlu0 0
      %214 = vperm.xlu0 %213, %v206
      %v215 = vpop.permute.xlu0 %214
      %vm217 = vcmask 64512
      %v219 = vsel %vm217, %v199, 0
      %v222 = vsel %vm217, %v200, 0
      %224 = vmatprep.subr.mxu0 %v202
      %225 = vmatpush1.msra.mxu0 %v201
      %226 = vmatprep.subr.mxu0 0.0
      %227 = vmatpush1.msra.mxu0 0.0
      %228 = vmatprep.subr.mxu0 0.0
      %229 = vmatpush1.msra.mxu0 0.0
      %230 = vmatprep.subr.mxu0 0.0
      %231 = vmatpush1.msra.mxu0 0.0
      %232 = vmatprep.subr.mxu0 0.0
      %233 = vmatpush1.msra.mxu0 0.0
      %234 = vmatprep.subr.mxu0 0.0
      %235 = vmatpush1.msra.mxu0 0.0
      %236 = vmatprep.subr.mxu0 0.0
      %237 = vmatpush1.msra.mxu0 0.0
      %238 = vmatprep.subr.mxu0 0.0
      %239 = vmatpush1.msra.mxu0 0.0
      %240 = vmatprep.subr.mxu0 0.0
      %241 = vmatpush1.msra.mxu0 0.0
      %242 = vmatprep.subr.mxu0 0.0
      %243 = vmatpush1.msra.mxu0 0.0
      %244 = vmatprep.subr.mxu0 0.0
      %245 = vmatpush1.msra.mxu0 0.0
      %246 = vmatprep.subr.mxu0 0.0
      %247 = vmatpush1.msra.mxu0 0.0
      %248 = vmatprep.subr.mxu0 0.0
      %249 = vmatpush1.msra.mxu0 0.0
      %250 = vmatprep.subr.mxu0 0.0
      %251 = vmatpush1.msra.mxu0 0.0
      %252 = vmatprep.subr.mxu0 0.0
      %253 = vmatpush1.msra.mxu0 0.0
      %254 = vmatprep.subr.mxu0 0.0
      %255 = vmatpush1.msra.mxu0 0.0
      %256 = vmatprep.subr.mxu0 0.0
      %257 = vmatpush1.msra.mxu0 0.0
      %258 = vmatprep.subr.mxu0 0.0
      %259 = vmatpush1.msra.mxu0 0.0
      %260 = vmatprep.subr.mxu0 0.0
      %261 = vmatpush1.msra.mxu0 0.0
      %262 = vmatprep.subr.mxu0 0.0
      %263 = vmatpush1.msra.mxu0 0.0
      %264 = vmatprep.subr.mxu0 0.0
      %265 = vmatpush1.msra.mxu0 0.0
      %266 = vmatprep.subr.mxu0 0.0
      %267 = vmatpush1.msra.mxu0 0.0
      %268 = vmatprep.subr.mxu0 0.0
      %269 = vmatpush1.msra.mxu0 0.0
      %270 = vmatprep.subr.mxu0 0.0
      %271 = vmatpush1.msra.mxu0 0.0
      %272 = vmatprep.subr.mxu0 0.0
      %273 = vmatpush1.msra.mxu0 0.0
      %274 = vmatprep.subr.mxu0 0.0
      %275 = vmatpush1.msra.mxu0 0.0
      %276 = vmatprep.subr.mxu0 0.0
      %277 = vmatpush1.msra.mxu0 0.0
      %278 = vmatprep.subr.mxu0 0.0
      %279 = vmatpush1.msra.mxu0 0.0
      %280 = vmatprep.subr.mxu0 0.0
      %281 = vmatpush1.msra.mxu0 0.0
      %282 = vmatprep.subr.mxu0 0.0
      %283 = vmatpush1.msra.mxu0 0.0
      %284 = vmatprep.subr.mxu0 0.0
      %285 = vmatpush1.msra.mxu0 0.0
      %286 = vmatprep.subr.mxu0 0.0
      %287 = vmatpush1.msra.mxu0 0.0
      %288 = vmatprep.mubr.f32.mxu0 0.0
      %289 = vmatmul.mubr.f32.gmra.mrb[0].mxu0 %v219
      %v290 = vpop.f32.mrb[0].mxu0
      %v291 = vadd.f32 %v210, %v290
      %v292 = vpop.f32.mrb[0].mxu0
      %v293 = vadd.f32 %v210, %v292
      %294 = vmatprep.mubr.f32.mxu0 0.0
      %295 = vmatmul.mubr.f32.gmra.mrb[0].mxu0 %v222
      %v296 = vpop.f32.mrb[0].mxu0
      %v297 = vadd.f32 %v215, %v296
      %v298 = vpop.f32.mrb[0].mxu0
      %v299 = vadd.f32 %v215, %v298
      %300 = vdwg.mxu0
      %301 = vmatprep.subr.mxu0 %v204
      %302 = vmatpush1.msra.mxu0 %v203
      %303 = vmatprep.subr.mxu0 0.0
      %304 = vmatpush1.msra.mxu0 0.0
      %305 = vmatprep.subr.mxu0 0.0
      %306 = vmatpush1.msra.mxu0 0.0
      %307 = vmatprep.subr.mxu0 0.0
      %308 = vmatpush1.msra.mxu0 0.0
      %309 = vmatprep.subr.mxu0 0.0
      %310 = vmatpush1.msra.mxu0 0.0
      %311 = vmatprep.subr.mxu0 0.0
      %312 = vmatpush1.msra.mxu0 0.0
      %313 = vmatprep.subr.mxu0 0.0
      %314 = vmatpush1.msra.mxu0 0.0
      %315 = vmatprep.subr.mxu0 0.0
      %316 = vmatpush1.msra.mxu0 0.0
      %317 = vmatprep.subr.mxu0 0.0
      %318 = vmatpush1.msra.mxu0 0.0
      %319 = vmatprep.subr.mxu0 0.0
      %320 = vmatpush1.msra.mxu0 0.0
      %321 = vmatprep.subr.mxu0 0.0
      %322 = vmatpush1.msra.mxu0 0.0
      %323 = vmatprep.subr.mxu0 0.0
      %324 = vmatpush1.msra.mxu0 0.0
      %325 = vmatprep.subr.mxu0 0.0
      %326 = vmatpush1.msra.mxu0 0.0
      %327 = vmatprep.subr.mxu0 0.0
      %328 = vmatpush1.msra.mxu0 0.0
      %329 = vmatprep.subr.mxu0 0.0
      %330 = vmatpush1.msra.mxu0 0.0
      %331 = vmatprep.subr.mxu0 0.0
      %332 = vmatpush1.msra.mxu0 0.0
      %333 = vmatprep.subr.mxu0 0.0
      %334 = vmatpush1.msra.mxu0 0.0
      %335 = vmatprep.subr.mxu0 0.0
      %336 = vmatpush1.msra.mxu0 0.0
      %337 = vmatprep.subr.mxu0 0.0
      %338 = vmatpush1.msra.mxu0 0.0
      %339 = vmatprep.subr.mxu0 0.0
      %340 = vmatpush1.msra.mxu0 0.0
      %341 = vmatprep.subr.mxu0 0.0
      %342 = vmatpush1.msra.mxu0 0.0
      %343 = vmatprep.subr.mxu0 0.0
      %344 = vmatpush1.msra.mxu0 0.0
      %345 = vmatprep.subr.mxu0 0.0
      %346 = vmatpush1.msra.mxu0 0.0
      %347 = vmatprep.subr.mxu0 0.0
      %348 = vmatpush1.msra.mxu0 0.0
      %349 = vmatprep.subr.mxu0 0.0
      %350 = vmatpush1.msra.mxu0 0.0
      %351 = vmatprep.subr.mxu0 0.0
      %352 = vmatpush1.msra.mxu0 0.0
      %353 = vmatprep.subr.mxu0 0.0
      %354 = vmatpush1.msra.mxu0 0.0
      %355 = vmatprep.subr.mxu0 0.0
      %356 = vmatpush1.msra.mxu0 0.0
      %357 = vmatprep.subr.mxu0 0.0
      %358 = vmatpush1.msra.mxu0 0.0
      %359 = vmatprep.subr.mxu0 0.0
      %360 = vmatpush1.msra.mxu0 0.0
      %361 = vmatprep.subr.mxu0 0.0
      %362 = vmatpush1.msra.mxu0 0.0
      %363 = vmatprep.subr.mxu0 0.0
      %364 = vmatpush1.msra.mxu0 0.0
      %365 = vmatprep.mubr.f32.mxu0 0.0
      %366 = vmatmul.mubr.f32.gmra.mrb[0].mxu0 %v219
      %v367 = vpop.f32.mrb[0].mxu0
      %v368 = vadd.f32 %v210, %v367
      %v369 = vpop.f32.mrb[0].mxu0
      %v370 = vadd.f32 %v210, %v369
      %371 = vmatprep.mubr.f32.mxu0 0.0
      %372 = vmatmul.mubr.f32.gmra.mrb[0].mxu0 %v222
      %v373 = vpop.f32.mrb[0].mxu0
      %v374 = vadd.f32 %v215, %v373
      %v375 = vpop.f32.mrb[0].mxu0
      %v376 = vadd.f32 %v215, %v375
      %377 = vdwg.mxu0
      %v378 = vtanh.pop %v291
      %v379 = vtanh.pop %v293
      %v380 = vtanh.pop %v368
      %v381 = vtanh.pop %v370
      %v382 = vtanh.pop %v297
      %v383 = vtanh.pop %v299
      %v384 = vtanh.pop %v374
      %v385 = vtanh.pop %v376
      %v386 = vld [vmem:[%s2] sm:$0xff]
      %v387 = vld [vmem:[%s2 + $0x8] sm:$0xff]
      %s388 = scalar_lea.vmem %s3, 16
      %v389 = vld [vmem:[%s388] sm:$0xff]
      %v390 = vld [vmem:[%s388 + $0x8] sm:$0xff]
      %392 = vset.pattern.permute.xlu0 0
      %393 = vperm.xlu0 %392, %v389
      %v394 = vpop.permute.xlu0 %393
      %397 = vset.pattern.permute.xlu0 0
      %398 = vperm.xlu0 %397, %v390
      %v399 = vpop.permute.xlu0 %398
      %vm401 = vcmask 130048
      %v403 = vsel %vm401, %v386, 0
      %v406 = vsel %vm401, %v387, 0
      %408 = vmatprep.subr.mxu0 %v379
      %409 = vmatpush1.msra.mxu0 %v378
      %410 = vmatprep.subr.mxu0 %v383
      %411 = vmatpush1.msra.mxu0 %v382
      %412 = vmatprep.subr.mxu0 0.0
      %413 = vmatpush1.msra.mxu0 0.0
      %414 = vmatprep.subr.mxu0 0.0
      %415 = vmatpush1.msra.mxu0 0.0
      %416 = vmatprep.subr.mxu0 0.0
      %417 = vmatpush1.msra.mxu0 0.0
      %418 = vmatprep.subr.mxu0 0.0
      %419 = vmatpush1.msra.mxu0 0.0
      %420 = vmatprep.subr.mxu0 0.0
      %421 = vmatpush1.msra.mxu0 0.0
      %422 = vmatprep.subr.mxu0 0.0
      %423 = vmatpush1.msra.mxu0 0.0
      %424 = vmatprep.subr.mxu0 0.0
      %425 = vmatpush1.msra.mxu0 0.0
      %426 = vmatprep.subr.mxu0 0.0
      %427 = vmatpush1.msra.mxu0 0.0
      %428 = vmatprep.subr.mxu0 0.0
      %429 = vmatpush1.msra.mxu0 0.0
      %430 = vmatprep.subr.mxu0 0.0
      %431 = vmatpush1.msra.mxu0 0.0
      %432 = vmatprep.subr.mxu0 0.0
      %433 = vmatpush1.msra.mxu0 0.0
      %434 = vmatprep.subr.mxu0 0.0
      %435 = vmatpush1.msra.mxu0 0.0
      %436 = vmatprep.subr.mxu0 0.0
      %437 = vmatpush1.msra.mxu0 0.0
      %438 = vmatprep.subr.mxu0 0.0
      %439 = vmatpush1.msra.mxu0 0.0
      %440 = vmatprep.subr.mxu0 0.0
      %441 = vmatpush1.msra.mxu0 0.0
      %442 = vmatprep.subr.mxu0 0.0
      %443 = vmatpush1.msra.mxu0 0.0
      %444 = vmatprep.subr.mxu0 0.0
      %445 = vmatpush1.msra.mxu0 0.0
      %446 = vmatprep.subr.mxu0 0.0
      %447 = vmatpush1.msra.mxu0 0.0
      %448 = vmatprep.subr.mxu0 0.0
      %449 = vmatpush1.msra.mxu0 0.0
      %450 = vmatprep.subr.mxu0 0.0
      %451 = vmatpush1.msra.mxu0 0.0
      %452 = vmatprep.subr.mxu0 0.0
      %453 = vmatpush1.msra.mxu0 0.0
      %454 = vmatprep.subr.mxu0 0.0
      %455 = vmatpush1.msra.mxu0 0.0
      %456 = vmatprep.subr.mxu0 0.0
      %457 = vmatpush1.msra.mxu0 0.0
      %458 = vmatprep.subr.mxu0 0.0
      %459 = vmatpush1.msra.mxu0 0.0
      %460 = vmatprep.subr.mxu0 0.0
      %461 = vmatpush1.msra.mxu0 0.0
      %462 = vmatprep.subr.mxu0 0.0
      %463 = vmatpush1.msra.mxu0 0.0
      %464 = vmatprep.subr.mxu0 0.0
      %465 = vmatpush1.msra.mxu0 0.0
      %466 = vmatprep.subr.mxu0 0.0
      %467 = vmatpush1.msra.mxu0 0.0
      %468 = vmatprep.subr.mxu0 0.0
      %469 = vmatpush1.msra.mxu0 0.0
      %470 = vmatprep.subr.mxu0 0.0
      %471 = vmatpush1.msra.mxu0 0.0
      %472 = vmatprep.mubr.f32.mxu0 0.0
      %473 = vmatmul.mubr.f32.gmra.mrb[0].mxu0 %v403
      %v474 = vpop.f32.mrb[0].mxu0
      %v475 = vadd.f32 %v394, %v474
      %v476 = vpop.f32.mrb[0].mxu0
      %v477 = vadd.f32 %v394, %v476
      %478 = vmatprep.mubr.f32.mxu0 0.0
      %479 = vmatmul.mubr.f32.gmra.mrb[0].mxu0 %v406
      %v480 = vpop.f32.mrb[0].mxu0
      %v481 = vadd.f32 %v399, %v480
      %v482 = vpop.f32.mrb[0].mxu0
      %v483 = vadd.f32 %v399, %v482
      %484 = vdwg.mxu0
      %485 = vmatprep.subr.mxu0 %v381
      %486 = vmatpush1.msra.mxu0 %v380
      %487 = vmatprep.subr.mxu0 %v385
      %488 = vmatpush1.msra.mxu0 %v384
      %489 = vmatprep.subr.mxu0 0.0
      %490 = vmatpush1.msra.mxu0 0.0
      %491 = vmatprep.subr.mxu0 0.0
      %492 = vmatpush1.msra.mxu0 0.0
      %493 = vmatprep.subr.mxu0 0.0
      %494 = vmatpush1.msra.mxu0 0.0
      %495 = vmatprep.subr.mxu0 0.0
      %496 = vmatpush1.msra.mxu0 0.0
      %497 = vmatprep.subr.mxu0 0.0
      %498 = vmatpush1.msra.mxu0 0.0
      %499 = vmatprep.subr.mxu0 0.0
      %500 = vmatpush1.msra.mxu0 0.0
      %501 = vmatprep.subr.mxu0 0.0
      %502 = vmatpush1.msra.mxu0 0.0
      %503 = vmatprep.subr.mxu0 0.0
      %504 = vmatpush1.msra.mxu0 0.0
      %505 = vmatprep.subr.mxu0 0.0
      %506 = vmatpush1.msra.mxu0 0.0
      %507 = vmatprep.subr.mxu0 0.0
      %508 = vmatpush1.msra.mxu0 0.0
      %509 = vmatprep.subr.mxu0 0.0
      %510 = vmatpush1.msra.mxu0 0.0
      %511 = vmatprep.subr.mxu0 0.0
      %512 = vmatpush1.msra.mxu0 0.0
      %513 = vmatprep.subr.mxu0 0.0
      %514 = vmatpush1.msra.mxu0 0.0
      %515 = vmatprep.subr.mxu0 0.0
      %516 = vmatpush1.msra.mxu0 0.0
      %517 = vmatprep.subr.mxu0 0.0
      %518 = vmatpush1.msra.mxu0 0.0
      %519 = vmatprep.subr.mxu0 0.0
      %520 = vmatpush1.msra.mxu0 0.0
      %521 = vmatprep.subr.mxu0 0.0
      %522 = vmatpush1.msra.mxu0 0.0
      %523 = vmatprep.subr.mxu0 0.0
      %524 = vmatpush1.msra.mxu0 0.0
      %525 = vmatprep.subr.mxu0 0.0
      %526 = vmatpush1.msra.mxu0 0.0
      %527 = vmatprep.subr.mxu0 0.0
      %528 = vmatpush1.msra.mxu0 0.0
      %529 = vmatprep.subr.mxu0 0.0
      %530 = vmatpush1.msra.mxu0 0.0
      %531 = vmatprep.subr.mxu0 0.0
      %532 = vmatpush1.msra.mxu0 0.0
      %533 = vmatprep.subr.mxu0 0.0
      %534 = vmatpush1.msra.mxu0 0.0
      %535 = vmatprep.subr.mxu0 0.0
      %536 = vmatpush1.msra.mxu0 0.0
      %537 = vmatprep.subr.mxu0 0.0
      %538 = vmatpush1.msra.mxu0 0.0
      %539 = vmatprep.subr.mxu0 0.0
      %540 = vmatpush1.msra.mxu0 0.0
      %541 = vmatprep.subr.mxu0 0.0
      %542 = vmatpush1.msra.mxu0 0.0
      %543 = vmatprep.subr.mxu0 0.0
      %544 = vmatpush1.msra.mxu0 0.0
      %545 = vmatprep.subr.mxu0 0.0
      %546 = vmatpush1.msra.mxu0 0.0
      %547 = vmatprep.subr.mxu0 0.0
      %548 = vmatpush1.msra.mxu0 0.0
      %549 = vmatprep.mubr.f32.mxu0 0.0
      %550 = vmatmul.mubr.f32.gmra.mrb[0].mxu0 %v403
      %v551 = vpop.f32.mrb[0].mxu0
      %v552 = vadd.f32 %v394, %v551
      %v553 = vpop.f32.mrb[0].mxu0
      %v554 = vadd.f32 %v394, %v553
      %555 = vmatprep.mubr.f32.mxu0 0.0
      %556 = vmatmul.mubr.f32.gmra.mrb[0].mxu0 %v406
      %v557 = vpop.f32.mrb[0].mxu0
      %v558 = vadd.f32 %v399, %v557
      %v559 = vpop.f32.mrb[0].mxu0
      %v560 = vadd.f32 %v399, %v559
      %561 = vdwg.mxu0
      %v562 = vtanh.pop %v475
      %v563 = vtanh.pop %v477
      %v564 = vtanh.pop %v552
      %v565 = vtanh.pop %v554
      %v566 = vtanh.pop %v481
      %v567 = vtanh.pop %v483
      %v568 = vtanh.pop %v558
      %v569 = vtanh.pop %v560
      %s570 = scalar_lea.vmem %s2, 16
      %v571 = vld [vmem:[%s570] sm:$0xff]
      %v572 = vld [vmem:[%s570 + $0x8] sm:$0xff]
      %s573 = scalar_lea.vmem %s3, 32
      %v574 = vld [vmem:[%s573] sm:$0xff]
      %v575 = vld [vmem:[%s573 + $0x8] sm:$0xff]
      %577 = vset.pattern.permute.xlu0 0
      %578 = vperm.xlu0 %577, %v574
      %v579 = vpop.permute.xlu0 %578
      %582 = vset.pattern.permute.xlu0 0
      %583 = vperm.xlu0 %582, %v575
      %v584 = vpop.permute.xlu0 %583
      %v587 = vsel %vm401, %v571, 0
      %v590 = vsel %vm401, %v572, 0
      %592 = vmatprep.subr.mxu0 %v563
      %593 = vmatpush1.msra.mxu0 %v562
      %594 = vmatprep.subr.mxu0 %v567
      %595 = vmatpush1.msra.mxu0 %v566
      %596 = vmatprep.subr.mxu0 0.0
      %597 = vmatpush1.msra.mxu0 0.0
      %598 = vmatprep.subr.mxu0 0.0
      %599 = vmatpush1.msra.mxu0 0.0
      %600 = vmatprep.subr.mxu0 0.0
      %601 = vmatpush1.msra.mxu0 0.0
      %602 = vmatprep.subr.mxu0 0.0
      %603 = vmatpush1.msra.mxu0 0.0
      %604 = vmatprep.subr.mxu0 0.0
      %605 = vmatpush1.msra.mxu0 0.0
      %606 = vmatprep.subr.mxu0 0.0
      %607 = vmatpush1.msra.mxu0 0.0
      %608 = vmatprep.subr.mxu0 0.0
      %609 = vmatpush1.msra.mxu0 0.0
      %610 = vmatprep.subr.mxu0 0.0
      %611 = vmatpush1.msra.mxu0 0.0
      %612 = vmatprep.subr.mxu0 0.0
      %613 = vmatpush1.msra.mxu0 0.0
      %614 = vmatprep.subr.mxu0 0.0
      %615 = vmatpush1.msra.mxu0 0.0
      %616 = vmatprep.subr.mxu0 0.0
      %617 = vmatpush1.msra.mxu0 0.0
      %618 = vmatprep.subr.mxu0 0.0
      %619 = vmatpush1.msra.mxu0 0.0
      %620 = vmatprep.subr.mxu0 0.0
      %621 = vmatpush1.msra.mxu0 0.0
      %622 = vmatprep.subr.mxu0 0.0
      %623 = vmatpush1.msra.mxu0 0.0
      %624 = vmatprep.subr.mxu0 0.0
      %625 = vmatpush1.msra.mxu0 0.0
      %626 = vmatprep.subr.mxu0 0.0
      %627 = vmatpush1.msra.mxu0 0.0
      %628 = vmatprep.subr.mxu0 0.0
      %629 = vmatpush1.msra.mxu0 0.0
      %630 = vmatprep.subr.mxu0 0.0
      %631 = vmatpush1.msra.mxu0 0.0
      %632 = vmatprep.subr.mxu0 0.0
      %633 = vmatpush1.msra.mxu0 0.0
      %634 = vmatprep.subr.mxu0 0.0
      %635 = vmatpush1.msra.mxu0 0.0
      %636 = vmatprep.subr.mxu0 0.0
      %637 = vmatpush1.msra.mxu0 0.0
      %638 = vmatprep.subr.mxu0 0.0
      %639 = vmatpush1.msra.mxu0 0.0
      %640 = vmatprep.subr.mxu0 0.0
      %641 = vmatpush1.msra.mxu0 0.0
      %642 = vmatprep.subr.mxu0 0.0
      %643 = vmatpush1.msra.mxu0 0.0
      %644 = vmatprep.subr.mxu0 0.0
      %645 = vmatpush1.msra.mxu0 0.0
      %646 = vmatprep.subr.mxu0 0.0
      %647 = vmatpush1.msra.mxu0 0.0
      %648 = vmatprep.subr.mxu0 0.0
      %649 = vmatpush1.msra.mxu0 0.0
      %650 = vmatprep.subr.mxu0 0.0
      %651 = vmatpush1.msra.mxu0 0.0
      %652 = vmatprep.subr.mxu0 0.0
      %653 = vmatpush1.msra.mxu0 0.0
      %654 = vmatprep.subr.mxu0 0.0
      %655 = vmatpush1.msra.mxu0 0.0
      %656 = vmatprep.mubr.f32.mxu0 0.0
      %657 = vmatmul.mubr.f32.gmra.mrb[0].mxu0 %v587
      %v658 = vpop.f32.mrb[0].mxu0
      %v659 = vadd.f32 %v579, %v658
      %v660 = vpop.f32.mrb[0].mxu0
      %v661 = vadd.f32 %v579, %v660
      %662 = vmatprep.mubr.f32.mxu0 0.0
      %663 = vmatmul.mubr.f32.gmra.mrb[0].mxu0 %v590
      %v664 = vpop.f32.mrb[0].mxu0
      %v665 = vadd.f32 %v584, %v664
      %v666 = vpop.f32.mrb[0].mxu0
      %v667 = vadd.f32 %v584, %v666
      %668 = vdwg.mxu0
      %669 = vmatprep.subr.mxu0 %v565
      %670 = vmatpush1.msra.mxu0 %v564
      %671 = vmatprep.subr.mxu0 %v569
      %672 = vmatpush1.msra.mxu0 %v568
      %673 = vmatprep.subr.mxu0 0.0
      %674 = vmatpush1.msra.mxu0 0.0
      %675 = vmatprep.subr.mxu0 0.0
      %676 = vmatpush1.msra.mxu0 0.0
      %677 = vmatprep.subr.mxu0 0.0
      %678 = vmatpush1.msra.mxu0 0.0
      %679 = vmatprep.subr.mxu0 0.0
      %680 = vmatpush1.msra.mxu0 0.0
      %681 = vmatprep.subr.mxu0 0.0
      %682 = vmatpush1.msra.mxu0 0.0
      %683 = vmatprep.subr.mxu0 0.0
      %684 = vmatpush1.msra.mxu0 0.0
      %685 = vmatprep.subr.mxu0 0.0
      %686 = vmatpush1.msra.mxu0 0.0
      %687 = vmatprep.subr.mxu0 0.0
      %688 = vmatpush1.msra.mxu0 0.0
      %689 = vmatprep.subr.mxu0 0.0
      %690 = vmatpush1.msra.mxu0 0.0
      %691 = vmatprep.subr.mxu0 0.0
      %692 = vmatpush1.msra.mxu0 0.0
      %693 = vmatprep.subr.mxu0 0.0
      %694 = vmatpush1.msra.mxu0 0.0
      %695 = vmatprep.subr.mxu0 0.0
      %696 = vmatpush1.msra.mxu0 0.0
      %697 = vmatprep.subr.mxu0 0.0
      %698 = vmatpush1.msra.mxu0 0.0
      %699 = vmatprep.subr.mxu0 0.0
      %700 = vmatpush1.msra.mxu0 0.0
      %701 = vmatprep.subr.mxu0 0.0
      %702 = vmatpush1.msra.mxu0 0.0
      %703 = vmatprep.subr.mxu0 0.0
      %704 = vmatpush1.msra.mxu0 0.0
      %705 = vmatprep.subr.mxu0 0.0
      %706 = vmatpush1.msra.mxu0 0.0
      %707 = vmatprep.subr.mxu0 0.0
      %708 = vmatpush1.msra.mxu0 0.0
      %709 = vmatprep.subr.mxu0 0.0
      %710 = vmatpush1.msra.mxu0 0.0
      %711 = vmatprep.subr.mxu0 0.0
      %712 = vmatpush1.msra.mxu0 0.0
      %713 = vmatprep.subr.mxu0 0.0
      %714 = vmatpush1.msra.mxu0 0.0
      %715 = vmatprep.subr.mxu0 0.0
      %716 = vmatpush1.msra.mxu0 0.0
      %717 = vmatprep.subr.mxu0 0.0
      %718 = vmatpush1.msra.mxu0 0.0
      %719 = vmatprep.subr.mxu0 0.0
      %720 = vmatpush1.msra.mxu0 0.0
      %721 = vmatprep.subr.mxu0 0.0
      %722 = vmatpush1.msra.mxu0 0.0
      %723 = vmatprep.subr.mxu0 0.0
      %724 = vmatpush1.msra.mxu0 0.0
      %725 = vmatprep.subr.mxu0 0.0
      %726 = vmatpush1.msra.mxu0 0.0
      %727 = vmatprep.subr.mxu0 0.0
      %728 = vmatpush1.msra.mxu0 0.0
      %729 = vmatprep.subr.mxu0 0.0
      %730 = vmatpush1.msra.mxu0 0.0
      %731 = vmatprep.subr.mxu0 0.0
      %732 = vmatpush1.msra.mxu0 0.0
      %733 = vmatprep.mubr.f32.mxu0 0.0
      %734 = vmatmul.mubr.f32.gmra.mrb[0].mxu0 %v587
      %v735 = vpop.f32.mrb[0].mxu0
      %v736 = vadd.f32 %v579, %v735
      %v737 = vpop.f32.mrb[0].mxu0
      %v738 = vadd.f32 %v579, %v737
      %739 = vmatprep.mubr.f32.mxu0 0.0
      %740 = vmatmul.mubr.f32.gmra.mrb[0].mxu0 %v590
      %v741 = vpop.f32.mrb[0].mxu0
      %v742 = vadd.f32 %v584, %v741
      %v743 = vpop.f32.mrb[0].mxu0
      %v744 = vadd.f32 %v584, %v743
      %745 = vdwg.mxu0
      %v746 = vtanh.pop %v659
      %v747 = vtanh.pop %v661
      %v748 = vtanh.pop %v736
      %v749 = vtanh.pop %v738
      %v750 = vtanh.pop %v665
      %v751 = vtanh.pop %v667
      %v752 = vtanh.pop %v742
      %v753 = vtanh.pop %v744
      %s754 = scalar_lea.vmem %s2, 32
      %v755 = vld [vmem:[%s754] sm:$0xff]
      %v756 = vld [vmem:[%s754 + $0x8] sm:$0xff]
      %s757 = scalar_lea.vmem %s3, 48
      %v758 = vld [vmem:[%s757] sm:$0xff]
      %v759 = vld [vmem:[%s757 + $0x8] sm:$0xff]
      %761 = vset.pattern.permute.xlu0 0
      %762 = vperm.xlu0 %761, %v758
      %v763 = vpop.permute.xlu0 %762
      %766 = vset.pattern.permute.xlu0 0
      %767 = vperm.xlu0 %766, %v759
      %v768 = vpop.permute.xlu0 %767
      %v771 = vsel %vm401, %v755, 0
      %v774 = vsel %vm401, %v756, 0
      %776 = vmatprep.subr.mxu0 %v747
      %777 = vmatpush1.msra.mxu0 %v746
      %778 = vmatprep.subr.mxu0 %v751
      %779 = vmatpush1.msra.mxu0 %v750
      %780 = vmatprep.subr.mxu0 0.0
      %781 = vmatpush1.msra.mxu0 0.0
      %782 = vmatprep.subr.mxu0 0.0
      %783 = vmatpush1.msra.mxu0 0.0
      %784 = vmatprep.subr.mxu0 0.0
      %785 = vmatpush1.msra.mxu0 0.0
      %786 = vmatprep.subr.mxu0 0.0
      %787 = vmatpush1.msra.mxu0 0.0
      %788 = vmatprep.subr.mxu0 0.0
      %789 = vmatpush1.msra.mxu0 0.0
      %790 = vmatprep.subr.mxu0 0.0
      %791 = vmatpush1.msra.mxu0 0.0
      %792 = vmatprep.subr.mxu0 0.0
      %793 = vmatpush1.msra.mxu0 0.0
      %794 = vmatprep.subr.mxu0 0.0
      %795 = vmatpush1.msra.mxu0 0.0
      %796 = vmatprep.subr.mxu0 0.0
      %797 = vmatpush1.msra.mxu0 0.0
      %798 = vmatprep.subr.mxu0 0.0
      %799 = vmatpush1.msra.mxu0 0.0
      %800 = vmatprep.subr.mxu0 0.0
      %801 = vmatpush1.msra.mxu0 0.0
      %802 = vmatprep.subr.mxu0 0.0
      %803 = vmatpush1.msra.mxu0 0.0
      %804 = vmatprep.subr.mxu0 0.0
      %805 = vmatpush1.msra.mxu0 0.0
      %806 = vmatprep.subr.mxu0 0.0
      %807 = vmatpush1.msra.mxu0 0.0
      %808 = vmatprep.subr.mxu0 0.0
      %809 = vmatpush1.msra.mxu0 0.0
      %810 = vmatprep.subr.mxu0 0.0
      %811 = vmatpush1.msra.mxu0 0.0
      %812 = vmatprep.subr.mxu0 0.0
      %813 = vmatpush1.msra.mxu0 0.0
      %814 = vmatprep.subr.mxu0 0.0
      %815 = vmatpush1.msra.mxu0 0.0
      %816 = vmatprep.subr.mxu0 0.0
      %817 = vmatpush1.msra.mxu0 0.0
      %818 = vmatprep.subr.mxu0 0.0
      %819 = vmatpush1.msra.mxu0 0.0
      %820 = vmatprep.subr.mxu0 0.0
      %821 = vmatpush1.msra.mxu0 0.0
      %822 = vmatprep.subr.mxu0 0.0
      %823 = vmatpush1.msra.mxu0 0.0
      %824 = vmatprep.subr.mxu0 0.0
      %825 = vmatpush1.msra.mxu0 0.0
      %826 = vmatprep.subr.mxu0 0.0
      %827 = vmatpush1.msra.mxu0 0.0
      %828 = vmatprep.subr.mxu0 0.0
      %829 = vmatpush1.msra.mxu0 0.0
      %830 = vmatprep.subr.mxu0 0.0
      %831 = vmatpush1.msra.mxu0 0.0
      %832 = vmatprep.subr.mxu0 0.0
      %833 = vmatpush1.msra.mxu0 0.0
      %834 = vmatprep.subr.mxu0 0.0
      %835 = vmatpush1.msra.mxu0 0.0
      %836 = vmatprep.subr.mxu0 0.0
      %837 = vmatpush1.msra.mxu0 0.0
      %838 = vmatprep.subr.mxu0 0.0
      %839 = vmatpush1.msra.mxu0 0.0
      %840 = vmatprep.mubr.f32.mxu0 0.0
      %841 = vmatmul.mubr.f32.gmra.mrb[0].mxu0 %v771
      %v842 = vpop.f32.mrb[0].mxu0
      %v843 = vadd.f32 %v763, %v842
      %v844 = vpop.f32.mrb[0].mxu0
      %v845 = vadd.f32 %v763, %v844
      %846 = vmatprep.mubr.f32.mxu0 0.0
      %847 = vmatmul.mubr.f32.gmra.mrb[0].mxu0 %v774
      %v848 = vpop.f32.mrb[0].mxu0
      %v849 = vadd.f32 %v768, %v848
      %v850 = vpop.f32.mrb[0].mxu0
      %v851 = vadd.f32 %v768, %v850
      %852 = vdwg.mxu0
      %853 = vmatprep.subr.mxu0 %v749
      %854 = vmatpush1.msra.mxu0 %v748
      %855 = vmatprep.subr.mxu0 %v753
      %856 = vmatpush1.msra.mxu0 %v752
      %857 = vmatprep.subr.mxu0 0.0
      %858 = vmatpush1.msra.mxu0 0.0
      %859 = vmatprep.subr.mxu0 0.0
      %860 = vmatpush1.msra.mxu0 0.0
      %861 = vmatprep.subr.mxu0 0.0
      %862 = vmatpush1.msra.mxu0 0.0
      %863 = vmatprep.subr.mxu0 0.0
      %864 = vmatpush1.msra.mxu0 0.0
      %865 = vmatprep.subr.mxu0 0.0
      %866 = vmatpush1.msra.mxu0 0.0
      %867 = vmatprep.subr.mxu0 0.0
      %868 = vmatpush1.msra.mxu0 0.0
      %869 = vmatprep.subr.mxu0 0.0
      %870 = vmatpush1.msra.mxu0 0.0
      %871 = vmatprep.subr.mxu0 0.0
      %872 = vmatpush1.msra.mxu0 0.0
      %873 = vmatprep.subr.mxu0 0.0
      %874 = vmatpush1.msra.mxu0 0.0
      %875 = vmatprep.subr.mxu0 0.0
      %876 = vmatpush1.msra.mxu0 0.0
      %877 = vmatprep.subr.mxu0 0.0
      %878 = vmatpush1.msra.mxu0 0.0
      %879 = vmatprep.subr.mxu0 0.0
      %880 = vmatpush1.msra.mxu0 0.0
      %881 = vmatprep.subr.mxu0 0.0
      %882 = vmatpush1.msra.mxu0 0.0
      %883 = vmatprep.subr.mxu0 0.0
      %884 = vmatpush1.msra.mxu0 0.0
      %885 = vmatprep.subr.mxu0 0.0
      %886 = vmatpush1.msra.mxu0 0.0
      %887 = vmatprep.subr.mxu0 0.0
      %888 = vmatpush1.msra.mxu0 0.0
      %889 = vmatprep.subr.mxu0 0.0
      %890 = vmatpush1.msra.mxu0 0.0
      %891 = vmatprep.subr.mxu0 0.0
      %892 = vmatpush1.msra.mxu0 0.0
      %893 = vmatprep.subr.mxu0 0.0
      %894 = vmatpush1.msra.mxu0 0.0
      %895 = vmatprep.subr.mxu0 0.0
      %896 = vmatpush1.msra.mxu0 0.0
      %897 = vmatprep.subr.mxu0 0.0
      %898 = vmatpush1.msra.mxu0 0.0
      %899 = vmatprep.subr.mxu0 0.0
      %900 = vmatpush1.msra.mxu0 0.0
      %901 = vmatprep.subr.mxu0 0.0
      %902 = vmatpush1.msra.mxu0 0.0
      %903 = vmatprep.subr.mxu0 0.0
      %904 = vmatpush1.msra.mxu0 0.0
      %905 = vmatprep.subr.mxu0 0.0
      %906 = vmatpush1.msra.mxu0 0.0
      %907 = vmatprep.subr.mxu0 0.0
      %908 = vmatpush1.msra.mxu0 0.0
      %909 = vmatprep.subr.mxu0 0.0
      %910 = vmatpush1.msra.mxu0 0.0
      %911 = vmatprep.subr.mxu0 0.0
      %912 = vmatpush1.msra.mxu0 0.0
      %913 = vmatprep.subr.mxu0 0.0
      %914 = vmatpush1.msra.mxu0 0.0
      %915 = vmatprep.subr.mxu0 0.0
      %916 = vmatpush1.msra.mxu0 0.0
      %917 = vmatprep.mubr.f32.mxu0 0.0
      %918 = vmatmul.mubr.f32.gmra.mrb[0].mxu0 %v771
      %v919 = vpop.f32.mrb[0].mxu0
      %v920 = vadd.f32 %v763, %v919
      %v921 = vpop.f32.mrb[0].mxu0
      %v922 = vadd.f32 %v763, %v921
      %923 = vmatprep.mubr.f32.mxu0 0.0
      %924 = vmatmul.mubr.f32.gmra.mrb[0].mxu0 %v774
      %v925 = vpop.f32.mrb[0].mxu0
      %v926 = vadd.f32 %v768, %v925
      %v927 = vpop.f32.mrb[0].mxu0
      %v928 = vadd.f32 %v768, %v927
      %929 = vdwg.mxu0
      %v930 = vtanh.pop %v843
      %v931 = vtanh.pop %v845
      %v932 = vtanh.pop %v920
      %v933 = vtanh.pop %v922
      %v934 = vtanh.pop %v849
      %v935 = vtanh.pop %v851
      %v936 = vtanh.pop %v926
      %v937 = vtanh.pop %v928
      %s938 = scalar_lea.vmem %s2, 48
      %v939 = vld [vmem:[%s938] sm:$0xff]
      %v940 = vld [vmem:[%s938 + $0x8] sm:$0xff]
      %s941 = scalar_lea.vmem %s3, 64
      %v942 = vld [vmem:[%s941] sm:$0xff]
      %v943 = vld [vmem:[%s941 + $0x8] sm:$0xff]
      %945 = vset.pattern.permute.xlu0 0
      %946 = vperm.xlu0 %945, %v942
      %v947 = vpop.permute.xlu0 %946
      %950 = vset.pattern.permute.xlu0 0
      %951 = vperm.xlu0 %950, %v943
      %v952 = vpop.permute.xlu0 %951
      %v955 = vsel %vm401, %v939, 0
      %v958 = vsel %vm401, %v940, 0
      %960 = vmatprep.subr.mxu0 %v931
      %961 = vmatpush1.msra.mxu0 %v930
      %962 = vmatprep.subr.mxu0 %v935
      %963 = vmatpush1.msra.mxu0 %v934
      %964 = vmatprep.subr.mxu0 0.0
      %965 = vmatpush1.msra.mxu0 0.0
      %966 = vmatprep.subr.mxu0 0.0
      %967 = vmatpush1.msra.mxu0 0.0
      %968 = vmatprep.subr.mxu0 0.0
      %969 = vmatpush1.msra.mxu0 0.0
      %970 = vmatprep.subr.mxu0 0.0
      %971 = vmatpush1.msra.mxu0 0.0
      %972 = vmatprep.subr.mxu0 0.0
      %973 = vmatpush1.msra.mxu0 0.0
      %974 = vmatprep.subr.mxu0 0.0
      %975 = vmatpush1.msra.mxu0 0.0
      %976 = vmatprep.subr.mxu0 0.0
      %977 = vmatpush1.msra.mxu0 0.0
      %978 = vmatprep.subr.mxu0 0.0
      %979 = vmatpush1.msra.mxu0 0.0
      %980 = vmatprep.subr.mxu0 0.0
      %981 = vmatpush1.msra.mxu0 0.0
      %982 = vmatprep.subr.mxu0 0.0
      %983 = vmatpush1.msra.mxu0 0.0
      %984 = vmatprep.subr.mxu0 0.0
      %985 = vmatpush1.msra.mxu0 0.0
      %986 = vmatprep.subr.mxu0 0.0
      %987 = vmatpush1.msra.mxu0 0.0
      %988 = vmatprep.subr.mxu0 0.0
      %989 = vmatpush1.msra.mxu0 0.0
      %990 = vmatprep.subr.mxu0 0.0
      %991 = vmatpush1.msra.mxu0 0.0
      %992 = vmatprep.subr.mxu0 0.0
      %993 = vmatpush1.msra.mxu0 0.0
      %994 = vmatprep.subr.mxu0 0.0
      %995 = vmatpush1.msra.mxu0 0.0
      %996 = vmatprep.subr.mxu0 0.0
      %997 = vmatpush1.msra.mxu0 0.0
      %998 = vmatprep.subr.mxu0 0.0
      %999 = vmatpush1.msra.mxu0 0.0
      %1000 = vmatprep.subr.mxu0 0.0
      %1001 = vmatpush1.msra.mxu0 0.0
      %1002 = vmatprep.subr.mxu0 0.0
      %1003 = vmatpush1.msra.mxu0 0.0
      %1004 = vmatprep.subr.mxu0 0.0
      %1005 = vmatpush1.msra.mxu0 0.0
      %1006 = vmatprep.subr.mxu0 0.0
      %1007 = vmatpush1.msra.mxu0 0.0
      %1008 = vmatprep.subr.mxu0 0.0
      %1009 = vmatpush1.msra.mxu0 0.0
      %1010 = vmatprep.subr.mxu0 0.0
      %1011 = vmatpush1.msra.mxu0 0.0
      %1012 = vmatprep.subr.mxu0 0.0
      %1013 = vmatpush1.msra.mxu0 0.0
      %1014 = vmatprep.subr.mxu0 0.0
      %1015 = vmatpush1.msra.mxu0 0.0
      %1016 = vmatprep.subr.mxu0 0.0
      %1017 = vmatpush1.msra.mxu0 0.0
      %1018 = vmatprep.subr.mxu0 0.0
      %1019 = vmatpush1.msra.mxu0 0.0
      %1020 = vmatprep.subr.mxu0 0.0
      %1021 = vmatpush1.msra.mxu0 0.0
      %1022 = vmatprep.subr.mxu0 0.0
      %1023 = vmatpush1.msra.mxu0 0.0
      %1024 = vmatprep.mubr.f32.mxu0 0.0
      %1025 = vmatmul.mubr.f32.gmra.mrb[0].mxu0 %v955
      %v1026 = vpop.f32.mrb[0].mxu0
      %v1027 = vadd.f32 %v947, %v1026
      %v1028 = vpop.f32.mrb[0].mxu0
      %v1029 = vadd.f32 %v947, %v1028
      %1030 = vmatprep.mubr.f32.mxu0 0.0
      %1031 = vmatmul.mubr.f32.gmra.mrb[0].mxu0 %v958
      %v1032 = vpop.f32.mrb[0].mxu0
      %v1033 = vadd.f32 %v952, %v1032
      %v1034 = vpop.f32.mrb[0].mxu0
      %v1035 = vadd.f32 %v952, %v1034
      %1036 = vdwg.mxu0
      %1037 = vmatprep.subr.mxu0 %v933
      %1038 = vmatpush1.msra.mxu0 %v932
      %1039 = vmatprep.subr.mxu0 %v937
      %1040 = vmatpush1.msra.mxu0 %v936
      %1041 = vmatprep.subr.mxu0 0.0
      %1042 = vmatpush1.msra.mxu0 0.0
      %1043 = vmatprep.subr.mxu0 0.0
      %1044 = vmatpush1.msra.mxu0 0.0
      %1045 = vmatprep.subr.mxu0 0.0
      %1046 = vmatpush1.msra.mxu0 0.0
      %1047 = vmatprep.subr.mxu0 0.0
      %1048 = vmatpush1.msra.mxu0 0.0
      %1049 = vmatprep.subr.mxu0 0.0
      %1050 = vmatpush1.msra.mxu0 0.0
      %1051 = vmatprep.subr.mxu0 0.0
      %1052 = vmatpush1.msra.mxu0 0.0
      %1053 = vmatprep.subr.mxu0 0.0
      %1054 = vmatpush1.msra.mxu0 0.0
      %1055 = vmatprep.subr.mxu0 0.0
      %1056 = vmatpush1.msra.mxu0 0.0
      %1057 = vmatprep.subr.mxu0 0.0
      %1058 = vmatpush1.msra.mxu0 0.0
      %1059 = vmatprep.subr.mxu0 0.0
      %1060 = vmatpush1.msra.mxu0 0.0
      %1061 = vmatprep.subr.mxu0 0.0
      %1062 = vmatpush1.msra.mxu0 0.0
      %1063 = vmatprep.subr.mxu0 0.0
      %1064 = vmatpush1.msra.mxu0 0.0
      %1065 = vmatprep.subr.mxu0 0.0
      %1066 = vmatpush1.msra.mxu0 0.0
      %1067 = vmatprep.subr.mxu0 0.0
      %1068 = vmatpush1.msra.mxu0 0.0
      %1069 = vmatprep.subr.mxu0 0.0
      %1070 = vmatpush1.msra.mxu0 0.0
      %1071 = vmatprep.subr.mxu0 0.0
      %1072 = vmatpush1.msra.mxu0 0.0
      %1073 = vmatprep.subr.mxu0 0.0
      %1074 = vmatpush1.msra.mxu0 0.0
      %1075 = vmatprep.subr.mxu0 0.0
      %1076 = vmatpush1.msra.mxu0 0.0
      %1077 = vmatprep.subr.mxu0 0.0
      %1078 = vmatpush1.msra.mxu0 0.0
      %1079 = vmatprep.subr.mxu0 0.0
      %1080 = vmatpush1.msra.mxu0 0.0
      %1081 = vmatprep.subr.mxu0 0.0
      %1082 = vmatpush1.msra.mxu0 0.0
      %1083 = vmatprep.subr.mxu0 0.0
      %1084 = vmatpush1.msra.mxu0 0.0
      %1085 = vmatprep.subr.mxu0 0.0
      %1086 = vmatpush1.msra.mxu0 0.0
      %1087 = vmatprep.subr.mxu0 0.0
      %1088 = vmatpush1.msra.mxu0 0.0
      %1089 = vmatprep.subr.mxu0 0.0
      %1090 = vmatpush1.msra.mxu0 0.0
      %1091 = vmatprep.subr.mxu0 0.0
      %1092 = vmatpush1.msra.mxu0 0.0
      %1093 = vmatprep.subr.mxu0 0.0
      %1094 = vmatpush1.msra.mxu0 0.0
      %1095 = vmatprep.subr.mxu0 0.0
      %1096 = vmatpush1.msra.mxu0 0.0
      %1097 = vmatprep.subr.mxu0 0.0
      %1098 = vmatpush1.msra.mxu0 0.0
      %1099 = vmatprep.subr.mxu0 0.0
      %1100 = vmatpush1.msra.mxu0 0.0
      %1101 = vmatprep.mubr.f32.mxu0 0.0
      %1102 = vmatmul.mubr.f32.gmra.mrb[0].mxu0 %v955
      %v1103 = vpop.f32.mrb[0].mxu0
      %v1104 = vadd.f32 %v947, %v1103
      %v1105 = vpop.f32.mrb[0].mxu0
      %v1106 = vadd.f32 %v947, %v1105
      %1107 = vmatprep.mubr.f32.mxu0 0.0
      %1108 = vmatmul.mubr.f32.gmra.mrb[0].mxu0 %v958
      %v1109 = vpop.f32.mrb[0].mxu0
      %v1110 = vadd.f32 %v952, %v1109
      %v1111 = vpop.f32.mrb[0].mxu0
      %v1112 = vadd.f32 %v952, %v1111
      %1113 = vdwg.mxu0
      %v1114 = vtanh.pop %v1027
      %v1115 = vtanh.pop %v1029
      %v1116 = vtanh.pop %v1104
      %v1117 = vtanh.pop %v1106
      %v1118 = vtanh.pop %v1033
      %v1119 = vtanh.pop %v1035
      %v1120 = vtanh.pop %v1110
      %v1121 = vtanh.pop %v1112
      %s1122 = scalar_lea.vmem %s2, 64
      %v1123 = vld [vmem:[%s1122] sm:$0xff]
      %v1124 = vld [vmem:[%s1122 + $0x8] sm:$0xff]
      %s1125 = scalar_lea.vmem %s3, 80
      %v1126 = vld [vmem:[%s1125] sm:$0xff]
      %v1127 = vld [vmem:[%s1125 + $0x8] sm:$0xff]
      %1129 = vset.pattern.permute.xlu0 0
      %1130 = vperm.xlu0 %1129, %v1126
      %v1131 = vpop.permute.xlu0 %1130
      %1134 = vset.pattern.permute.xlu0 0
      %1135 = vperm.xlu0 %1134, %v1127
      %v1136 = vpop.permute.xlu0 %1135
      %v1138 = vsel %vm401, %v1123, 0
      %v1141 = vsel %vm401, %v1124, 0
      %1143 = vmatprep.subr.mxu0 %v1115
      %1144 = vmatpush1.msra.mxu0 %v1114
      %1145 = vmatprep.subr.mxu0 %v1119
      %1146 = vmatpush1.msra.mxu0 %v1118
      %1147 = vmatprep.subr.mxu0 0.0
      %1148 = vmatpush1.msra.mxu0 0.0
      %1149 = vmatprep.subr.mxu0 0.0
      %1150 = vmatpush1.msra.mxu0 0.0
      %1151 = vmatprep.subr.mxu0 0.0
      %1152 = vmatpush1.msra.mxu0 0.0
      %1153 = vmatprep.subr.mxu0 0.0
      %1154 = vmatpush1.msra.mxu0 0.0
      %1155 = vmatprep.subr.mxu0 0.0
      %1156 = vmatpush1.msra.mxu0 0.0
      %1157 = vmatprep.subr.mxu0 0.0
      %1158 = vmatpush1.msra.mxu0 0.0
      %1159 = vmatprep.subr.mxu0 0.0
      %1160 = vmatpush1.msra.mxu0 0.0
      %1161 = vmatprep.subr.mxu0 0.0
      %1162 = vmatpush1.msra.mxu0 0.0
      %1163 = vmatprep.subr.mxu0 0.0
      %1164 = vmatpush1.msra.mxu0 0.0
      %1165 = vmatprep.subr.mxu0 0.0
      %1166 = vmatpush1.msra.mxu0 0.0
      %1167 = vmatprep.subr.mxu0 0.0
      %1168 = vmatpush1.msra.mxu0 0.0
      %1169 = vmatprep.subr.mxu0 0.0
      %1170 = vmatpush1.msra.mxu0 0.0
      %1171 = vmatprep.subr.mxu0 0.0
      %1172 = vmatpush1.msra.mxu0 0.0
      %1173 = vmatprep.subr.mxu0 0.0
      %1174 = vmatpush1.msra.mxu0 0.0
      %1175 = vmatprep.subr.mxu0 0.0
      %1176 = vmatpush1.msra.mxu0 0.0
      %1177 = vmatprep.subr.mxu0 0.0
      %1178 = vmatpush1.msra.mxu0 0.0
      %1179 = vmatprep.subr.mxu0 0.0
      %1180 = vmatpush1.msra.mxu0 0.0
      %1181 = vmatprep.subr.mxu0 0.0
      %1182 = vmatpush1.msra.mxu0 0.0
      %1183 = vmatprep.subr.mxu0 0.0
      %1184 = vmatpush1.msra.mxu0 0.0
      %1185 = vmatprep.subr.mxu0 0.0
      %1186 = vmatpush1.msra.mxu0 0.0
      %1187 = vmatprep.subr.mxu0 0.0
      %1188 = vmatpush1.msra.mxu0 0.0
      %1189 = vmatprep.subr.mxu0 0.0
      %1190 = vmatpush1.msra.mxu0 0.0
      %1191 = vmatprep.subr.mxu0 0.0
      %1192 = vmatpush1.msra.mxu0 0.0
      %1193 = vmatprep.subr.mxu0 0.0
      %1194 = vmatpush1.msra.mxu0 0.0
      %1195 = vmatprep.subr.mxu0 0.0
      %1196 = vmatpush1.msra.mxu0 0.0
      %1197 = vmatprep.subr.mxu0 0.0
      %1198 = vmatpush1.msra.mxu0 0.0
      %1199 = vmatprep.subr.mxu0 0.0
      %1200 = vmatpush1.msra.mxu0 0.0
      %1201 = vmatprep.subr.mxu0 0.0
      %1202 = vmatpush1.msra.mxu0 0.0
      %1203 = vmatprep.subr.mxu0 0.0
      %1204 = vmatpush1.msra.mxu0 0.0
      %1205 = vmatprep.subr.mxu0 0.0
      %1206 = vmatpush1.msra.mxu0 0.0
      %1207 = vmatprep.mubr.f32.mxu0 0.0
      %1208 = vmatmul.mubr.f32.gmra.mrb[0].mxu0 %v1138
      %v1209 = vpop.f32.mrb[0].mxu0
      %v1210 = vadd.f32 %v1131, %v1209
      %v1211 = vpop.f32.mrb[0].mxu0
      %v1212 = vadd.f32 %v1131, %v1211
      %1213 = vmatprep.mubr.f32.mxu0 0.0
      %1214 = vmatmul.mubr.f32.gmra.mrb[0].mxu0 %v1141
      %v1215 = vpop.f32.mrb[0].mxu0
      %v1216 = vpop.f32.mrb[0].mxu0
      %1217 = vdwg.mxu0
      %1218 = vmatprep.subr.mxu0 %v1117
      %1219 = vmatpush1.msra.mxu0 %v1116
      %1220 = vmatprep.subr.mxu0 %v1121
      %1221 = vmatpush1.msra.mxu0 %v1120
      %1222 = vmatprep.subr.mxu0 0.0
      %1223 = vmatpush1.msra.mxu0 0.0
      %1224 = vmatprep.subr.mxu0 0.0
      %1225 = vmatpush1.msra.mxu0 0.0
      %1226 = vmatprep.subr.mxu0 0.0
      %1227 = vmatpush1.msra.mxu0 0.0
      %1228 = vmatprep.subr.mxu0 0.0
      %1229 = vmatpush1.msra.mxu0 0.0
      %1230 = vmatprep.subr.mxu0 0.0
      %1231 = vmatpush1.msra.mxu0 0.0
      %1232 = vmatprep.subr.mxu0 0.0
      %1233 = vmatpush1.msra.mxu0 0.0
      %1234 = vmatprep.subr.mxu0 0.0
      %1235 = vmatpush1.msra.mxu0 0.0
      %1236 = vmatprep.subr.mxu0 0.0
      %1237 = vmatpush1.msra.mxu0 0.0
      %1238 = vmatprep.subr.mxu0 0.0
      %1239 = vmatpush1.msra.mxu0 0.0
      %1240 = vmatprep.subr.mxu0 0.0
      %1241 = vmatpush1.msra.mxu0 0.0
      %1242 = vmatprep.subr.mxu0 0.0
      %1243 = vmatpush1.msra.mxu0 0.0
      %1244 = vmatprep.subr.mxu0 0.0
      %1245 = vmatpush1.msra.mxu0 0.0
      %1246 = vmatprep.subr.mxu0 0.0
      %1247 = vmatpush1.msra.mxu0 0.0
      %1248 = vmatprep.subr.mxu0 0.0
      %1249 = vmatpush1.msra.mxu0 0.0
      %1250 = vmatprep.subr.mxu0 0.0
      %1251 = vmatpush1.msra.mxu0 0.0
      %1252 = vmatprep.subr.mxu0 0.0
      %1253 = vmatpush1.msra.mxu0 0.0
      %1254 = vmatprep.subr.mxu0 0.0
      %1255 = vmatpush1.msra.mxu0 0.0
      %1256 = vmatprep.subr.mxu0 0.0
      %1257 = vmatpush1.msra.mxu0 0.0
      %1258 = vmatprep.subr.mxu0 0.0
      %1259 = vmatpush1.msra.mxu0 0.0
      %1260 = vmatprep.subr.mxu0 0.0
      %1261 = vmatpush1.msra.mxu0 0.0
      %1262 = vmatprep.subr.mxu0 0.0
      %1263 = vmatpush1.msra.mxu0 0.0
      %1264 = vmatprep.subr.mxu0 0.0
      %1265 = vmatpush1.msra.mxu0 0.0
      %1266 = vmatprep.subr.mxu0 0.0
      %1267 = vmatpush1.msra.mxu0 0.0
      %1268 = vmatprep.subr.mxu0 0.0
      %1269 = vmatpush1.msra.mxu0 0.0
      %1270 = vmatprep.subr.mxu0 0.0
      %1271 = vmatpush1.msra.mxu0 0.0
      %1272 = vmatprep.subr.mxu0 0.0
      %1273 = vmatpush1.msra.mxu0 0.0
      %1274 = vmatprep.subr.mxu0 0.0
      %1275 = vmatpush1.msra.mxu0 0.0
      %1276 = vmatprep.subr.mxu0 0.0
      %1277 = vmatpush1.msra.mxu0 0.0
      %1278 = vmatprep.subr.mxu0 0.0
      %1279 = vmatpush1.msra.mxu0 0.0
      %1280 = vmatprep.subr.mxu0 0.0
      %1281 = vmatpush1.msra.mxu0 0.0
      %1282 = vmatprep.mubr.f32.mxu0 0.0
      %1283 = vmatmul.mubr.f32.gmra.mrb[0].mxu0 %v1138
      %v1284 = vpop.f32.mrb[0].mxu0
      %v1285 = vadd.f32 %v1131, %v1284
      %v1286 = vpop.f32.mrb[0].mxu0
      %v1287 = vadd.f32 %v1131, %v1286
      %1288 = vmatprep.mubr.f32.mxu0 0.0
      %1289 = vmatmul.mubr.f32.gmra.mrb[0].mxu0 %v1141
      %v1290 = vpop.f32.mrb[0].mxu0
      %v1291 = vpop.f32.mrb[0].mxu0
      %1292 = vdwg.mxu0
      %v1297 = vcombine.low %v1210, %v1212
      %v1298 = vcombine.low %v1285, %v1287
      %v1300 = vunpack.c.l.s4 1966171168
      %v1301 = vunpack.c.0.s8 %v1300
      %v1302 = vlaneseq
      %v1303 = vshrl.u32 %v1302, 7
      %v1304 = vsub.s32 %v1301, %v1303
      %v1305 = vrot.slane %v1297, %v1304
      %v1307 = vunpack.c.l.s4 1966171168
      %v1308 = vunpack.c.0.s8 %v1307
      %v1309 = vlaneseq
      %v1310 = vshrl.u32 %v1309, 7
      %v1311 = vsub.s32 %v1308, %v1310
      %v1312 = vrot.slane %v1298, %v1311
      %v1313 = vcombine.low %v1305, %v1312
      %v1315 = vunpack.c.l.s4 1966171168
      %v1316 = vunpack.c.0.s8 %v1315
      %v1317 = vlaneseq
      %v1318 = vshrl.u32 %v1317, 7
      %v1319 = vsub.s32 %v1316, %v1318
      %v1320 = vrot.slane %v1313, %v1319
      %v1322 = vlaneseq
      %vm1323 = vcmp.ge.s32.totalorder %v1322, 0
      %vm1324 = vcmp.lt.s32.totalorder %v1322, 512
      %vm1325 = vmand %vm1323, %vm1324
      %1326 = vst.msk [vmem:[%s197] sm:$0xf] %vm1325, %v1320
      %s1327 = smul.u32 4, %s15
      %p1328 = scmp.lt.s32.totalorder %s1327, 7
      %s1329 = scalar_select %p1328, %s1327, 7
      %s1330 = scalar_lea.vmem %s4, %s1329
      // Predicated region
      $region37: #{fcn_forward.1} parent=35 // pred_check
        %p1331 = pneg %p122
      $region38: #{fcn_forward.1} parent=35 // pred_check_branch
        %1333 = sbr.rel (%p1331) target = $region40
      $region39: #{fcn_forward.1} parent=35 // pred_region
        %s1334 = smul.u32 4, %s15
      $region40: #{fcn_forward.1} parent=35 // pred_fallthru
        _
    $region36: #{fcn_forward.1} parent=5 // pred_fallthru
      _
    %p1335 = scmp.le.s32.totalorder 2, %s10
    // Predicated region
    $region41: #{fcn_forward.1} parent=5 // pred_check
      %p1336 = pneg %p1335
    $region42: #{fcn_forward.1} parent=5 // pred_check_branch
      %1338 = sbr.rel (%p1336) target = $region44
    $region43: #{fcn_forward.1} parent=5 // pred_region
      %s1339 = ssub.s32 %s10, 2
      // Predicated region
      $region45: #{fcn_forward.1} parent=43 // pred_check
        %p1340 = pneg %p128
      $region46: #{fcn_forward.1} parent=43 // pred_check_branch
        %1342 = sbr.rel (%p1340) target = $region48
      $region47: #{fcn_forward.1} parent=43 // pred_region
        %s1343 = smul.u32 4, %s16
        %p1344 = scmp.lt.s32.totalorder %s1343, 7
        %s1345 = scalar_select %p1344, %s1343, 7
        %s1346 = scalar_lea.vmem %s4, %s1345
      $region48: #{fcn_forward.1} parent=43 // pred_fallthru
        _
    $region44: #{fcn_forward.1} parent=5 // pred_fallthru
      _
  $region6: #{fcn_forward.1} parent=0 // loop_footer
    %s14 = sadd.s32 1, %s10
  $region7: #{fcn_forward.1} parent=0 // loop_footer_branch
    %9 = sbr.rel target = $region3
  $region8: #{fcn_forward.1} parent=0 // loop_exit
    _

</llo_original>
